<compile_context>
chip_gen: v6e
topology: v6e:2x2x1
jax: 0.10.0
libtpu: 0.0.40
codegen_flags: <defaults>
</compile_context>

<pallas_src>
import math
import functools

import jax
import jax.numpy as jnp
from jax.experimental import pallas as pl
from jax.experimental.pallas import tpu as pltpu


# ---------------------------------------------------------------------------
# Kernels (operate on flattened, lane-dense (tile_S, B*D) blocks).
# ---------------------------------------------------------------------------
def _pe_add_kernel(x_ref, pe_ref, o_ref):
    o_ref[...] = (x_ref[...] + pe_ref[...]).astype(o_ref.dtype)


def _pe_add_dropout_kernel(x_ref, pe_ref, bits_ref, o_ref, *, threshold, scale):
    y = x_ref[...] + pe_ref[...]
    # Inverted dropout: keep with prob (1 - p), scale kept values by 1/(1-p).
    # uint32 threshold compare — no float conversion of the random bits.
    keep = bits_ref[...] >= jnp.uint32(threshold)
    y = jnp.where(keep, y * jnp.asarray(scale, dtype=y.dtype), jnp.zeros_like(y))
    o_ref[...] = y.astype(o_ref.dtype)


# ---------------------------------------------------------------------------
# Parameter (buffer) construction — deterministic, mirrors the PyTorch __init__.
# ---------------------------------------------------------------------------
def make_positional_encoding_table(d_model: int, max_len: int = 4) -> jnp.ndarray:
    assert d_model % 2 == 0, "d_model must be even (same limitation as PyTorch original)"
    position = jnp.arange(0, max_len, dtype=jnp.float32)[:, None]          # (L, 1)
    div_term = jnp.exp(
        jnp.arange(0, d_model, 2, dtype=jnp.float32) * (-math.log(10000.0) / d_model)
    )                                                                       # (D/2,)
    pe = jnp.zeros((max_len, d_model), dtype=jnp.float32)
    pe = pe.at[:, 0::2].set(jnp.sin(position * div_term))
    pe = pe.at[:, 1::2].set(jnp.cos(position * div_term))
    # PyTorch: pe.unsqueeze(0).transpose(0, 1) -> (max_len, 1, d_model)
    return pe[:, None, :]


# ---------------------------------------------------------------------------
# Tile-size chooser: biggest 8-multiple seq tile whose per-stream block is
# ~<= target_bytes (default 2 MiB).  With up to 4 streams double-buffered this
# keeps the pipeline footprint well under the 64 MiB v7x VMEM ceiling while
# avoiding tiny tiles (per-grid-step overhead ~0.35 us).
# ---------------------------------------------------------------------------
def _choose_seq_tile(seq, lane_width, itemsize, target_bytes=2 << 20):
    if seq * lane_width * itemsize <= target_bytes:
        return seq                                   # whole thing in one block
    ts = (target_bytes // (lane_width * itemsize)) // 8 * 8
    ts = max(8, ts)                                   # keep (8, 128) tiling legal
    return min(ts, seq)


# ---------------------------------------------------------------------------
# Wrapper: layout plumbing (flatten, pe broadcast, RNG bits) in plain JAX,
# elementwise compute in the Pallas kernel.
# ---------------------------------------------------------------------------
def positional_encoding_forward(x, pe, *, p=0.1, train=False, rng=None):
    """x: (seq, batch, d_model); pe: (max_len, 1, d_model). Returns same shape as x."""
    S, B, D = x.shape
    BD = B * D
    itemsize = jnp.dtype(x.dtype).itemsize

    # Lane-dense layout: last dim = B*D (256 for the demo -> unmasked stores).
    x2 = x.reshape(S, BD)
    pe_flat = (
        jnp.broadcast_to(pe[:S], (S, B, D)).reshape(S, BD).astype(x.dtype)
    )

    ts = _choose_seq_tile(S, BD, itemsize)
    grid = (pl.cdiv(S, ts),)
    spec = pl.BlockSpec((ts, BD), lambda i: (i, 0))
    cparams = pltpu.CompilerParams(dimension_semantics=("parallel",))

    if train and p > 0.0:
        if rng is None:
            rng = jax.random.PRNGKey(0)
        bits = jax.random.bits(rng, (S, BD), dtype=jnp.uint32)
        threshold = min(int(round(float(p) * 2.0 ** 32)), 2 ** 32 - 1)
        scale = 1.0 / (1.0 - float(p))
        kernel = functools.partial(
            _pe_add_dropout_kernel, threshold=threshold, scale=scale
        )
        out = pl.pallas_call(
            kernel,
            out_shape=jax.ShapeDtypeStruct((S, BD), x.dtype),
            grid=grid,
            in_specs=[spec, spec, spec],
            out_specs=spec,
            compiler_params=cparams,
        )(x2, pe_flat, bits)
    else:
        out = pl.pallas_call(
            _pe_add_kernel,
            out_shape=jax.ShapeDtypeStruct((S, BD), x.dtype),
            grid=grid,
            in_specs=[spec, spec],
            out_specs=spec,
            compiler_params=cparams,
        )(x2, pe_flat)

    return out.reshape(S, B, D)


if __name__ == "__main__":
    # Small shapes consistent with the module: max_len=4 -> seq<=4.
    d_model, max_len = 32, 4
    seq, batch = 4, 8
    p = 0.1

    key = jax.random.PRNGKey(0)
    kx, kdrop = jax.random.split(key)
    x = jax.random.normal(kx, (seq, batch, d_model), dtype=jnp.float32)

    pe = make_positional_encoding_table(d_model, max_len)
    ref = x + pe[:seq]

    # Eval mode (dropout is identity) — check against pure-JAX reference.
    y_eval = positional_encoding_forward(x, pe, p=p, train=False)
    y_eval = jax.block_until_ready(y_eval)
    assert y_eval.shape == x.shape and y_eval.dtype == x.dtype
    assert jnp.allclose(y_eval, ref, atol=1e-6), "eval-mode mismatch"

    # Train mode (inverted dropout). Every output element must be either 0 or
    # (x + pe) / (1 - p).
    y_train = positional_encoding_forward(x, pe, p=p, train=True, rng=kdrop)
    y_train = jax.block_until_ready(y_train)
    assert y_train.shape == x.shape and y_train.dtype == x.dtype
    scaled = ref / (1.0 - p)
    kept = jnp.isclose(y_train, scaled, atol=1e-5)
    dropped = jnp.isclose(y_train, 0.0, atol=1e-7)
    assert bool(jnp.all(kept | dropped)), "train-mode dropout values invalid"

    print("KERNEL_OK")
</pallas_src>

<mosaic_0001>
module attributes {stable_mosaic.version = 11 : i64} {
  func.func @_pe_add_kernel(%arg0: i32, %arg1: memref<4x256xf32, #tpu.memory_space<vmem>>, %arg2: memref<4x256xf32, #tpu.memory_space<vmem>>, %arg3: memref<4x256xf32, #tpu.memory_space<vmem>>) attributes {dimension_semantics = [#tpu.dimension_semantics<parallel>], iteration_bounds = array<i64: 1>, scalar_prefetch = 0 : i64, scratch_operands = 0 : i64, tpu.core_type = #tpu.core_type<tc>, window_params = [{transform_indices = @transform_0, window_bounds = array<i64: 4, 256>}, {transform_indices = @transform_1, window_bounds = array<i64: 4, 256>}, {transform_indices = @transform_2, window_bounds = array<i64: 4, 256>}]} {
    %c0 = arith.constant 0 : index
    %c0_0 = arith.constant 0 : index
    %0 = vector.load %arg1[%c0, %c0_0] : memref<4x256xf32, #tpu.memory_space<vmem>>, vector<4x256xf32>
    %c0_1 = arith.constant 0 : index
    %c0_2 = arith.constant 0 : index
    %1 = vector.load %arg2[%c0_1, %c0_2] : memref<4x256xf32, #tpu.memory_space<vmem>>, vector<4x256xf32>
    %2 = arith.addf %0, %1 : vector<4x256xf32>
    %c0_3 = arith.constant 0 : index
    %c0_4 = arith.constant 0 : index
    %3 = vector.load %arg3[%c0_3, %c0_4] : memref<4x256xf32, #tpu.memory_space<vmem>>, vector<4x256xf32>
    tpu.vector_store %arg3[%c0_3, %c0_4], %2 {strides = array<i32>} : memref<4x256xf32, #tpu.memory_space<vmem>>, vector<4x256xf32>,
    return
  }
  func.func @transform_0(%arg0: i32) -> (i32, i32) {
    %c0_i32 = arith.constant 0 : i32
    %c0_i32_0 = arith.constant 0 : i32
    return %arg0, %c0_i32 : i32, i32
  }
  func.func @transform_1(%arg0: i32) -> (i32, i32) {
    %c0_i32 = arith.constant 0 : i32
    %c0_i32_0 = arith.constant 0 : i32
    return %arg0, %c0_i32 : i32, i32
  }
  func.func @transform_2(%arg0: i32) -> (i32, i32) {
    %c0_i32 = arith.constant 0 : i32
    %c0_i32_0 = arith.constant 0 : i32
    return %arg0, %c0_i32 : i32, i32
  }
}

</mosaic_0001>

<llo_original>
// kernel: tpu_custom_call.1
$region0: #{tpu_custom_call.1}
  #allocation0 [shape = 'u32[]', space=smem, size = 0x4, offset = 0x4, fixed_abs, tag = 'smem constant byte address 0x4 - core index']
  #allocation1 [shape = 'u32[144,128]{1,0:T(1,128)}', space=vmem, size = 0x12000, scoped, tag = 'internal scratch']
  %s0 = inlined_call_operand.hbm [shape: f32[4,256], index: 0, kind: input, shape index: {}]
  %s1 = inlined_call_operand.hbm [shape: f32[4,256], index: 1, kind: input, shape index: {}]
  %s2 = inlined_call_operand.hbm [shape: f32[4,256], index: 2, kind: output, shape index: {}]
  %s3 = sld [smem:[#allocation0]]
  $region26: #{tpu_custom_call.1} parent=0
    _
  %s5 = ssub.s32 1, %s3
  %s6 = scalar_select 0, %s5, %s3
  $region1: #{tpu_custom_call.1} parent=0
    #allocation2 [shape = 'u8[4096]{0}', space=vmem, size = 0x1000, scoped, tag = 'input window, operand 0, single buffered']
    #allocation3 [shape = 's32[1]{0}', space=sflag, size = 0x4, scoped, tag = 'scoped memory for tpu_custom_call.1']
    #allocation4 [shape = 's32[1]{0}', space=sflag, size = 0x4, scoped, tag = 'scoped memory for tpu_custom_call.1']
    #allocation5 [shape = 'u8[4096]{0}', space=vmem, size = 0x1000, scoped, tag = 'input window, operand 1, single buffered']
    #allocation6 [shape = 's32[1]{0}', space=sflag, size = 0x4, scoped, tag = 'scoped memory for tpu_custom_call.1']
    #allocation7 [shape = 'u8[4096]{0}', space=vmem, size = 0x1000, scoped, tag = 'output window, operand 0, single buffered']
    %7 = vsyncpa [#allocation3], 0
    %8 = vsyncpa [#allocation6], 0
    %9 = vsyncpa [#allocation4], 0
    // Predicated region
    $region2: #{tpu_custom_call.1} parent=1 // pred_check
      _
    $region3: #{tpu_custom_call.1} parent=1 // pred_check_branch
      %11 = sbr.rel (0) target = $region5
    $region4: #{tpu_custom_call.1} parent=1 // pred_region
      %s13 = ssub.s32 128, 128
      %14 = vsyncadd [#allocation3], %s13
      %s16 = sshll.u32 [#allocation2], 4
      %s17 = int_to_ptr.vmem [resolvable:$true] %s16
      %19 = dma.hbm_to_vmem [thread:$0]  %s0, 128, %s17, [#allocation3]
    $region5: #{tpu_custom_call.1} parent=1 // pred_fallthru
      _
    // Predicated region
    $region6: #{tpu_custom_call.1} parent=1 // pred_check
      _
    $region7: #{tpu_custom_call.1} parent=1 // pred_check_branch
      %21 = sbr.rel (0) target = $region9
    $region8: #{tpu_custom_call.1} parent=1 // pred_region
      %s23 = ssub.s32 128, 128
      %24 = vsyncadd [#allocation6], %s23
      %s26 = sshll.u32 [#allocation5], 4
      %s27 = int_to_ptr.vmem [resolvable:$true] %s26
      %29 = dma.hbm_to_vmem [thread:$0]  %s1, 128, %s27, [#allocation6]
    $region9: #{tpu_custom_call.1} parent=1 // pred_fallthru
      _
    // Predicated region
    $region10: #{tpu_custom_call.1} parent=1 // pred_check
      _
    $region11: #{tpu_custom_call.1} parent=1 // pred_check_branch
      %31 = sbr.rel (0) target = $region13
    $region12: #{tpu_custom_call.1} parent=1 // pred_region
      %32 = dma.done [#allocation3], 128
    $region13: #{tpu_custom_call.1} parent=1 // pred_fallthru
      _
    // Predicated region
    $region14: #{tpu_custom_call.1} parent=1 // pred_check
      _
    $region15: #{tpu_custom_call.1} parent=1 // pred_check_branch
      %34 = sbr.rel (0) target = $region17
    $region16: #{tpu_custom_call.1} parent=1 // pred_region
      %35 = dma.done [#allocation6], 128
    $region17: #{tpu_custom_call.1} parent=1 // pred_fallthru
      _
    %v36 = vld [vmem:[#allocation2] sm:$0xff]
    %v37 = vld [vmem:[#allocation5] sm:$0xff]
    %v38 = vadd.f32 %v36, %v37
    %39 = vst [vmem:[#allocation7] sm:$0xff] %v38
    // Predicated region
    $region18: #{tpu_custom_call.1} parent=1 // pred_check
      _
    $region19: #{tpu_custom_call.1} parent=1 // pred_check_branch
      %41 = sbr.rel (0) target = $region21
    $region20: #{tpu_custom_call.1} parent=1 // pred_region
      %s43 = ssub.s32 128, 128
      %44 = vsyncadd [#allocation4], %s43
      %s46 = sshll.u32 [#allocation7], 4
      %s47 = int_to_ptr.vmem [resolvable:$true] %s46
      %49 = dma.vmem_to_hbm [thread:$0]  %s47, 128, %s2, [#allocation4]
    $region21: #{tpu_custom_call.1} parent=1 // pred_fallthru
      _
    // Predicated region
    $region22: #{tpu_custom_call.1} parent=1 // pred_check
      _
    $region23: #{tpu_custom_call.1} parent=1 // pred_check_branch
      %51 = sbr.rel (0) target = $region25
    $region24: #{tpu_custom_call.1} parent=1 // pred_region
      %52 = dma.done [#allocation4], 128
    $region25: #{tpu_custom_call.1} parent=1 // pred_fallthru
      _
    %53 = vsyncpa [#allocation3], 1
    %54 = vsyncpa [#allocation6], 1
    %55 = vsyncpa [#allocation4], 1

</llo_original>
